<compile_context>
chip_gen: v7x
topology: tpu7x:2x2x1
jax: 0.10.0
libtpu: 0.0.40
codegen_flags: <defaults>
</compile_context>

<pallas_src>
import jax
import jax.numpy as jnp
import numpy as np
from jax.experimental import pallas as pl
from jax.experimental.pallas import tpu as pltpu

EPS = 1e-5  # PyTorch InstanceNorm1d default eps (affine=False, no running stats)


def _residual_block_kernel(x_ref, w1_ref, w2_ref, o_ref):
    # x_ref / o_ref : (bt, C, L) batch tile of the (B, C, L) tensor.
    # w*_ref        : (3, C_out, C_in) conv tap weights, already in the MXU dtype.
    bt, _, L = x_ref.shape
    mxu_dtype = w1_ref.dtype

    # Reflection-boundary masks as (1, L) rows; selects broadcast over the C sublanes.
    col = jax.lax.broadcasted_iota(jnp.int32, (1, L), 1)
    is_left = col == 0
    is_right = col == (L - 1)

    w1 = w1_ref[...]
    w2 = w2_ref[...]

    def conv_instnorm(h, w):
        # ReflectionPad1d(1) + Conv1d(k=3) + InstanceNorm1d(affine=False) on one (C, L)
        # batch element (h is f32).
        if L % 128 == 0:
            # Lane rotations on the XLU; wrap columns are wrong only at col==0 / L-1
            # and are fixed by the reflection selects below.  Non-negative shifts only.
            h_l = pltpu.roll(h, shift=1, axis=1)      # h[:, i-1]   (wraps at i=0)
            h_r = pltpu.roll(h, shift=L - 1, axis=1)  # h[:, i+1]   (wraps at i=L-1)
        else:
            # Ragged/small-L fallback: slice+select (edge columns fixed below anyway).
            h_l = jnp.concatenate([h[:, :1], h[:, :-1]], axis=1)
            h_r = jnp.concatenate([h[:, 1:], h[:, -1:]], axis=1)
        h_prev = jnp.where(is_left, h_r, h_l)   # reflection: index -1 -> 1
        h_next = jnp.where(is_right, h_l, h_r)  # reflection: index  L -> L-2

        # One MXU matmul per tap (no im2col concat), bf16 operands, f32 accumulation.
        # Conv bias intentionally omitted: cancelled exactly by the mean subtraction.
        y = jnp.dot(w[0], h_prev.astype(mxu_dtype), preferred_element_type=jnp.float32)
        y = y + jnp.dot(w[1], h.astype(mxu_dtype), preferred_element_type=jnp.float32)
        y = y + jnp.dot(w[2], h_next.astype(mxu_dtype), preferred_element_type=jnp.float32)

        # InstanceNorm1d(affine=False): per-(batch, channel) two-pass stats over L, f32.
        mean = jnp.mean(y, axis=1, keepdims=True)
        d = y - mean
        var = jnp.mean(d * d, axis=1, keepdims=True)
        return d * jax.lax.rsqrt(var + EPS)

    # Loop over the batch tile; pl.loop keeps the per-element temporaries loop-scoped
    # (so VMEM pressure does not grow with bt).
    @pl.loop(0, bt)
    def _(b):
        x = x_ref[b].astype(jnp.float32)
        h = conv_instnorm(x, w1)
        h = jnp.maximum(h, 0.0)                  # ReLU
        h = conv_instnorm(h, w2)
        o_ref[b] = (x + h).astype(o_ref.dtype)   # residual add


def _vmem_limit_bytes():
    """~3/4 of physical VMEM, capped at 96 MiB (v5e/v6e -> 96 MiB, v7x -> 48 MiB)."""
    try:
        cap = int(pltpu.get_tpu_info().vmem_capacity_bytes)
    except Exception:  # conservative fallback: assume the smallest per-core VMEM (v7x)
        cap = 64 * 1024 * 1024
    return int(min((cap * 3) // 4, 96 * 1024 * 1024))


def _pick_batch_tile(batch, per_batch_bytes, fixed_bytes, budget_bytes):
    """Largest divisor-of-batch tile fitting the VMEM budget, capped at batch//2 so the
    grid has >= 2 steps (keeps both v7x TensorCores busy; harmless on 1-TC chips)."""
    cap = max((budget_bytes - fixed_bytes) // max(per_batch_bytes, 1), 1)
    if batch >= 2:
        cap = min(cap, batch // 2)
    cap = int(max(min(cap, batch), 1))
    for bt in range(cap, 0, -1):
        if batch % bt == 0:
            return bt
    return 1


def residual_block(x, w1, b1, w2, b2, *, conv_dtype=jnp.bfloat16):
    """x: (B, C, L); w*: (C, C, 3) PyTorch Conv1d weights; b*: (C,) biases.

    NOTE: the per-channel conv biases are mathematical no-ops here because each conv is
    immediately followed by InstanceNorm1d(affine=False, track_running_stats=False),
    whose per-(batch, channel) mean subtraction cancels them exactly.  If the module
    were changed to use running/eval-mode statistics this shortcut no longer holds.
    """
    B, C, L = x.shape
    if L < 2:
        raise ValueError("ReflectionPad1d(1) requires length >= 2")
    del b1, b2  # cancelled by the InstanceNorm mean subtraction (see docstring)

    # (C_out, C_in, 3) -> (3, C_out, C_in) tap slabs, pre-cast to the MXU operand dtype.
    w1t = jnp.transpose(w1, (2, 0, 1)).astype(conv_dtype)
    w2t = jnp.transpose(w2, (2, 0, 1)).astype(conv_dtype)

    # VMEM accounting: double-buffered in/out blocks scale with bt; weights and the
    # loop-scoped f32 temporaries (~16 (C, L) slabs live per batch element) do not.
    vmem_limit = _vmem_limit_bytes()
    per_batch = 2 * 2 * C * L * x.dtype.itemsize
    fixed = 2 * 2 * 3 * C * C * np.dtype(conv_dtype).itemsize + 16 * C * L * 4
    bt = _pick_batch_tile(B, per_batch, fixed, budget_bytes=(2 * vmem_limit) // 3)

    return pl.pallas_call(
        _residual_block_kernel,
        out_shape=jax.ShapeDtypeStruct((B, C, L), x.dtype),
        grid=(B // bt,),
        in_specs=[
            pl.BlockSpec((bt, C, L), lambda i: (i, 0, 0)),   # input batch tile
            pl.BlockSpec((3, C, C), lambda i: (0, 0, 0)),    # conv1 tap weights
            pl.BlockSpec((3, C, C), lambda i: (0, 0, 0)),    # conv2 tap weights
        ],
        out_specs=pl.BlockSpec((bt, C, L), lambda i: (i, 0, 0)),
        compiler_params=pltpu.CompilerParams(
            dimension_semantics=("parallel",),   # batch tiles are independent
            vmem_limit_bytes=vmem_limit,
        ),
    )(x, w1t, w2t)


def ref_forward(x, w1, b1, w2, b2):
    """Pure-JAX reference mirroring the PyTorch module (bias included, f32 HIGHEST)."""
    def conv_in(h, w, b):
        hp = jnp.pad(h, ((0, 0), (0, 0), (1, 1)), mode="reflect")
        y = jax.lax.conv_general_dilated(
            hp, w, window_strides=(1,), padding="VALID",
            dimension_numbers=("NCH", "OIH", "NCH"),
            precision=jax.lax.Precision.HIGHEST) + b[None, :, None]
        m = y.mean(axis=2, keepdims=True)
        v = ((y - m) ** 2).mean(axis=2, keepdims=True)
        return (y - m) / jnp.sqrt(v + EPS)

    h = conv_in(x, w1, b1)
    h = jnp.maximum(h, 0.0)
    h = conv_in(h, w2, b2)
    return x + h


if __name__ == "__main__":
    # Small shapes consistent with the module: n_filters=8, one lane-native sequence
    # length (128) so stores are lane-dense and the XLU rotate path is exercised.
    B, C, L = 2, 8, 128
    key = jax.random.PRNGKey(0)
    kx, kw1, kb1, kw2, kb2 = jax.random.split(key, 5)

    x = jax.random.normal(kx, (B, C, L), dtype=jnp.float32)
    # PyTorch Conv1d weight layout: (C_out, C_in, kernel_size=3)
    w1 = 0.1 * jax.random.normal(kw1, (C, C, 3), dtype=jnp.float32)
    b1 = 0.1 * jax.random.normal(kb1, (C,), dtype=jnp.float32)
    w2 = 0.1 * jax.random.normal(kw2, (C, C, 3), dtype=jnp.float32)
    b2 = 0.1 * jax.random.normal(kb2, (C,), dtype=jnp.float32)

    out = jax.block_until_ready(residual_block(x, w1, b1, w2, b2))
    ref = ref_forward(x, w1, b1, w2, b2)

    # Tolerance covers bf16 MXU operands (per the perf review; stats/accumulation stay
    # f32).  Structural errors (wrong padding/taps/norm/residual) would be >> 1e-1.
    np.testing.assert_allclose(np.asarray(out), np.asarray(ref), rtol=2e-2, atol=2e-2)

    print("KERNEL_OK")
</pallas_src>

<mosaic_0001>
module attributes {stable_mosaic.version = 11 : i64} {
  func.func @_residual_block_kernel(%arg0: i32, %arg1: memref<1x8x128xf32, #tpu.memory_space<vmem>>, %arg2: memref<3x8x8xbf16, #tpu.memory_space<vmem>>, %arg3: memref<3x8x8xbf16, #tpu.memory_space<vmem>>, %arg4: memref<1x8x128xf32, #tpu.memory_space<vmem>>) attributes {dimension_semantics = [#tpu.dimension_semantics<parallel>], iteration_bounds = array<i64: 2>, scalar_prefetch = 0 : i64, scratch_operands = 0 : i64, tpu.core_type = #tpu.core_type<tc>, window_params = [{transform_indices = @transform_0, window_bounds = array<i64: 1, 8, 128>}, {pipeline_mode = #tpu.pipeline_mode<synchronous>, transform_indices = @transform_1, window_bounds = array<i64: 3, 8, 8>}, {pipeline_mode = #tpu.pipeline_mode<synchronous>, transform_indices = @transform_2, window_bounds = array<i64: 3, 8, 8>}, {transform_indices = @transform_3, window_bounds = array<i64: 1, 8, 128>}]} {
    %0 = tpu.iota {dimensions = array<i32: 1>} : vector<1x128xi32>
    %c0_i32 = arith.constant 0 : i32
    %1 = vector.broadcast %c0_i32 : i32 to vector<1x128xi32>
    %2 = arith.cmpi eq, %0, %1 : vector<1x128xi32>
    %c127_i32 = arith.constant 127 : i32
    %3 = vector.broadcast %c127_i32 : i32 to vector<1x128xi32>
    %4 = arith.cmpi eq, %0, %3 : vector<1x128xi32>
    %c0 = arith.constant 0 : index
    %c0_0 = arith.constant 0 : index
    %c0_1 = arith.constant 0 : index
    %5 = vector.load %arg2[%c0, %c0_0, %c0_1] : memref<3x8x8xbf16, #tpu.memory_space<vmem>>, vector<3x8x8xbf16>
    %c0_2 = arith.constant 0 : index
    %c0_3 = arith.constant 0 : index
    %c0_4 = arith.constant 0 : index
    %6 = vector.load %arg3[%c0_2, %c0_3, %c0_4] : memref<3x8x8xbf16, #tpu.memory_space<vmem>>, vector<3x8x8xbf16>
    %c0_i32_5 = arith.constant 0 : i32
    %c1_i32 = arith.constant 1 : i32
    %7 = arith.muli %c0_i32_5, %c1_i32 : i32
    %c0_i32_6 = arith.constant 0 : i32
    %8 = arith.addi %c0_i32_6, %7 : i32
    %9 = arith.index_cast %8 : i32 to index
    %c0_7 = arith.constant 0 : index
    %c0_8 = arith.constant 0 : index
    %10 = vector.load %arg1[%9, %c0_7, %c0_8] : memref<1x8x128xf32, #tpu.memory_space<vmem>>, vector<1x8x128xf32>
    %11 = vector.shape_cast %10 : vector<1x8x128xf32> to vector<8x128xf32>
    %c1_i32_9 = arith.constant 1 : i32
    %12 = tpu.dynamic_rotate %11 by %c1_i32_9 dim 1 : vector<8x128xf32>, i32 -> vector<8x128xf32>
    %c127_i32_10 = arith.constant 127 : i32
    %13 = tpu.dynamic_rotate %11 by %c127_i32_10 dim 1 : vector<8x128xf32>, i32 -> vector<8x128xf32>
    %14 = vector.shape_cast %2 : vector<1x128xi1> to vector<1x128xi1>
    %15 = vector.broadcast %14 : vector<1x128xi1> to vector<8x128xi1>
    %16 = arith.select %15, %13, %12 : vector<8x128xi1>, vector<8x128xf32>
    %17 = vector.shape_cast %4 : vector<1x128xi1> to vector<1x128xi1>
    %18 = vector.broadcast %17 : vector<1x128xi1> to vector<8x128xi1>
    %19 = arith.select %18, %12, %13 : vector<8x128xi1>, vector<8x128xf32>
    %20 = vector.extract_strided_slice %5 {offsets = [0, 0, 0], sizes = [1, 8, 8], strides = [1, 1, 1]} : vector<3x8x8xbf16> to vector<1x8x8xbf16>
    %21 = vector.shape_cast %20 : vector<1x8x8xbf16> to vector<8x8xbf16>
    %22 = arith.truncf %16 : vector<8x128xf32> to vector<8x128xbf16>
    %cst = arith.constant dense<0.000000e+00> : vector<8x128xf32>
    %23 = tpu.matmul %21, %22, %cst {dimension_numbers = #tpu.dot_dimension_numbers<[1], [0], [0], [1], [0, 0, 1, 1], [], []>} : vector<8x8xbf16>, vector<8x128xbf16>, vector<8x128xf32> -> vector<8x128xf32>
    %24 = vector.extract_strided_slice %5 {offsets = [1, 0, 0], sizes = [1, 8, 8], strides = [1, 1, 1]} : vector<3x8x8xbf16> to vector<1x8x8xbf16>
    %25 = vector.shape_cast %24 : vector<1x8x8xbf16> to vector<8x8xbf16>
    %26 = arith.truncf %11 : vector<8x128xf32> to vector<8x128xbf16>
    %cst_11 = arith.constant dense<0.000000e+00> : vector<8x128xf32>
    %27 = tpu.matmul %25, %26, %cst_11 {dimension_numbers = #tpu.dot_dimension_numbers<[1], [0], [0], [1], [0, 0, 1, 1], [], []>} : vector<8x8xbf16>, vector<8x128xbf16>, vector<8x128xf32> -> vector<8x128xf32>
    %28 = arith.addf %23, %27 : vector<8x128xf32>
    %29 = vector.extract_strided_slice %5 {offsets = [2, 0, 0], sizes = [1, 8, 8], strides = [1, 1, 1]} : vector<3x8x8xbf16> to vector<1x8x8xbf16>
    %30 = vector.shape_cast %29 : vector<1x8x8xbf16> to vector<8x8xbf16>
    %31 = arith.truncf %19 : vector<8x128xf32> to vector<8x128xbf16>
    %cst_12 = arith.constant dense<0.000000e+00> : vector<8x128xf32>
    %32 = tpu.matmul %30, %31, %cst_12 {dimension_numbers = #tpu.dot_dimension_numbers<[1], [0], [0], [1], [0, 0, 1, 1], [], []>} : vector<8x8xbf16>, vector<8x128xbf16>, vector<8x128xf32> -> vector<8x128xf32>
    %33 = arith.addf %28, %32 : vector<8x128xf32>
    %cst_13 = arith.constant dense<0.000000e+00> : vector<8xf32>
    %34 = vector.multi_reduction <add>, %33, %cst_13 [1] : vector<8x128xf32> to vector<8xf32>
    %35 = vector.shape_cast %34 : vector<8xf32> to vector<8x1xf32>
    %cst_14 = arith.constant 1.280000e+02 : f32
    %36 = vector.broadcast %cst_14 : f32 to vector<8x1xf32>
    %37 = arith.divf %35, %36 : vector<8x1xf32>
    %38 = vector.broadcast %37 : vector<8x1xf32> to vector<8x128xf32>
    %39 = arith.subf %33, %38 : vector<8x128xf32>
    %40 = arith.mulf %39, %39 : vector<8x128xf32>
    %cst_15 = arith.constant dense<0.000000e+00> : vector<8xf32>
    %41 = vector.multi_reduction <add>, %40, %cst_15 [1] : vector<8x128xf32> to vector<8xf32>
    %42 = vector.shape_cast %41 : vector<8xf32> to vector<8x1xf32>
    %cst_16 = arith.constant 1.280000e+02 : f32
    %43 = vector.broadcast %cst_16 : f32 to vector<8x1xf32>
    %44 = arith.divf %42, %43 : vector<8x1xf32>
    %cst_17 = arith.constant 9.99999974E-6 : f32
    %45 = vector.broadcast %cst_17 : f32 to vector<8x1xf32>
    %46 = arith.addf %44, %45 : vector<8x1xf32>
    %47 = math.rsqrt %46 : vector<8x1xf32>
    %48 = vector.broadcast %47 : vector<8x1xf32> to vector<8x128xf32>
    %49 = arith.mulf %39, %48 : vector<8x128xf32>
    %cst_18 = arith.constant 0.000000e+00 : f32
    %50 = vector.broadcast %cst_18 : f32 to vector<8x128xf32>
    %51 = arith.maximumf %49, %50 : vector<8x128xf32>
    %c1_i32_19 = arith.constant 1 : i32
    %52 = tpu.dynamic_rotate %51 by %c1_i32_19 dim 1 : vector<8x128xf32>, i32 -> vector<8x128xf32>
    %c127_i32_20 = arith.constant 127 : i32
    %53 = tpu.dynamic_rotate %51 by %c127_i32_20 dim 1 : vector<8x128xf32>, i32 -> vector<8x128xf32>
    %54 = vector.shape_cast %2 : vector<1x128xi1> to vector<1x128xi1>
    %55 = vector.broadcast %54 : vector<1x128xi1> to vector<8x128xi1>
    %56 = arith.select %55, %53, %52 : vector<8x128xi1>, vector<8x128xf32>
    %57 = vector.shape_cast %4 : vector<1x128xi1> to vector<1x128xi1>
    %58 = vector.broadcast %57 : vector<1x128xi1> to vector<8x128xi1>
    %59 = arith.select %58, %52, %53 : vector<8x128xi1>, vector<8x128xf32>
    %60 = vector.extract_strided_slice %6 {offsets = [0, 0, 0], sizes = [1, 8, 8], strides = [1, 1, 1]} : vector<3x8x8xbf16> to vector<1x8x8xbf16>
    %61 = vector.shape_cast %60 : vector<1x8x8xbf16> to vector<8x8xbf16>
    %62 = arith.truncf %56 : vector<8x128xf32> to vector<8x128xbf16>
    %cst_21 = arith.constant dense<0.000000e+00> : vector<8x128xf32>
    %63 = tpu.matmul %61, %62, %cst_21 {dimension_numbers = #tpu.dot_dimension_numbers<[1], [0], [0], [1], [0, 0, 1, 1], [], []>} : vector<8x8xbf16>, vector<8x128xbf16>, vector<8x128xf32> -> vector<8x128xf32>
    %64 = vector.extract_strided_slice %6 {offsets = [1, 0, 0], sizes = [1, 8, 8], strides = [1, 1, 1]} : vector<3x8x8xbf16> to vector<1x8x8xbf16>
    %65 = vector.shape_cast %64 : vector<1x8x8xbf16> to vector<8x8xbf16>
    %66 = arith.truncf %51 : vector<8x128xf32> to vector<8x128xbf16>
    %cst_22 = arith.constant dense<0.000000e+00> : vector<8x128xf32>
    %67 = tpu.matmul %65, %66, %cst_22 {dimension_numbers = #tpu.dot_dimension_numbers<[1], [0], [0], [1], [0, 0, 1, 1], [], []>} : vector<8x8xbf16>, vector<8x128xbf16>, vector<8x128xf32> -> vector<8x128xf32>
    %68 = arith.addf %63, %67 : vector<8x128xf32>
    %69 = vector.extract_strided_slice %6 {offsets = [2, 0, 0], sizes = [1, 8, 8], strides = [1, 1, 1]} : vector<3x8x8xbf16> to vector<1x8x8xbf16>
    %70 = vector.shape_cast %69 : vector<1x8x8xbf16> to vector<8x8xbf16>
    %71 = arith.truncf %59 : vector<8x128xf32> to vector<8x128xbf16>
    %cst_23 = arith.constant dense<0.000000e+00> : vector<8x128xf32>
    %72 = tpu.matmul %70, %71, %cst_23 {dimension_numbers = #tpu.dot_dimension_numbers<[1], [0], [0], [1], [0, 0, 1, 1], [], []>} : vector<8x8xbf16>, vector<8x128xbf16>, vector<8x128xf32> -> vector<8x128xf32>
    %73 = arith.addf %68, %72 : vector<8x128xf32>
    %cst_24 = arith.constant dense<0.000000e+00> : vector<8xf32>
    %74 = vector.multi_reduction <add>, %73, %cst_24 [1] : vector<8x128xf32> to vector<8xf32>
    %75 = vector.shape_cast %74 : vector<8xf32> to vector<8x1xf32>
    %cst_25 = arith.constant 1.280000e+02 : f32
    %76 = vector.broadcast %cst_25 : f32 to vector<8x1xf32>
    %77 = arith.divf %75, %76 : vector<8x1xf32>
    %78 = vector.broadcast %77 : vector<8x1xf32> to vector<8x128xf32>
    %79 = arith.subf %73, %78 : vector<8x128xf32>
    %80 = arith.mulf %79, %79 : vector<8x128xf32>
    %cst_26 = arith.constant dense<0.000000e+00> : vector<8xf32>
    %81 = vector.multi_reduction <add>, %80, %cst_26 [1] : vector<8x128xf32> to vector<8xf32>
    %82 = vector.shape_cast %81 : vector<8xf32> to vector<8x1xf32>
    %cst_27 = arith.constant 1.280000e+02 : f32
    %83 = vector.broadcast %cst_27 : f32 to vector<8x1xf32>
    %84 = arith.divf %82, %83 : vector<8x1xf32>
    %cst_28 = arith.constant 9.99999974E-6 : f32
    %85 = vector.broadcast %cst_28 : f32 to vector<8x1xf32>
    %86 = arith.addf %84, %85 : vector<8x1xf32>
    %87 = math.rsqrt %86 : vector<8x1xf32>
    %88 = vector.broadcast %87 : vector<8x1xf32> to vector<8x128xf32>
    %89 = arith.mulf %79, %88 : vector<8x128xf32>
    %90 = arith.addf %11, %89 : vector<8x128xf32>
    %91 = arith.index_cast %8 : i32 to index
    %c0_29 = arith.constant 0 : index
    %c0_30 = arith.constant 0 : index
    %92 = vector.load %arg4[%91, %c0_29, %c0_30] : memref<1x8x128xf32, #tpu.memory_space<vmem>>, vector<1x8x128xf32>
    %93 = vector.shape_cast %92 : vector<1x8x128xf32> to vector<8x128xf32>
    %94 = vector.shape_cast %90 : vector<8x128xf32> to vector<1x8x128xf32>
    tpu.vector_store %arg4[%91, %c0_29, %c0_30], %94 {strides = array<i32>} : memref<1x8x128xf32, #tpu.memory_space<vmem>>, vector<1x8x128xf32>,
    %c1_i32_31 = arith.constant 1 : i32
    return
  }
  func.func @transform_0(%arg0: i32) -> (i32, i32, i32) {
    %c0_i32 = arith.constant 0 : i32
    %c0_i32_0 = arith.constant 0 : i32
    %c0_i32_1 = arith.constant 0 : i32
    return %arg0, %c0_i32, %c0_i32_0 : i32, i32, i32
  }
  func.func @transform_1(%arg0: i32) -> (i32, i32, i32) {
    %c0_i32 = arith.constant 0 : i32
    %c0_i32_0 = arith.constant 0 : i32
    %c0_i32_1 = arith.constant 0 : i32
    %c0_i32_2 = arith.constant 0 : i32
    return %c0_i32, %c0_i32_0, %c0_i32_1 : i32, i32, i32
  }
  func.func @transform_2(%arg0: i32) -> (i32, i32, i32) {
    %c0_i32 = arith.constant 0 : i32
    %c0_i32_0 = arith.constant 0 : i32
    %c0_i32_1 = arith.constant 0 : i32
    %c0_i32_2 = arith.constant 0 : i32
    return %c0_i32, %c0_i32_0, %c0_i32_1 : i32, i32, i32
  }
  func.func @transform_3(%arg0: i32) -> (i32, i32, i32) {
    %c0_i32 = arith.constant 0 : i32
    %c0_i32_0 = arith.constant 0 : i32
    %c0_i32_1 = arith.constant 0 : i32
    return %arg0, %c0_i32, %c0_i32_0 : i32, i32, i32
  }
}

</mosaic_0001>

<llo_original>
// kernel: tpu_custom_call.1
$region0: #{tpu_custom_call.1}
  #allocation0 [shape = 'u32[]', space=smem, size = 0x4, offset = 0x4, fixed_abs, tag = 'smem constant byte address 0x4 - core index']
  #allocation1 [shape = 'u32[144,128]{1,0:T(1,128)}', space=vmem, size = 0x12000, scoped, tag = 'internal scratch']
  %s0 = inlined_call_operand.hbm [shape: f32[2,8,128], index: 0, kind: input, shape index: {}]
  %s1 = inlined_call_operand.hbm [shape: bf16[3,8,8], index: 1, kind: input, shape index: {}]
  %s2 = inlined_call_operand.hbm [shape: bf16[3,8,8], index: 2, kind: input, shape index: {}]
  %s3 = inlined_call_operand.hbm [shape: f32[2,8,128], index: 3, kind: output, shape index: {}]
  %s4 = sld [smem:[#allocation0]]
  $region57: #{tpu_custom_call.1} parent=0
    _
  %s6 = ssub.s32 1, %s4
  %s7 = scalar_select 0, %s6, %s4
  $region1: #{tpu_custom_call.1} parent=0
    #allocation2 [shape = 'u8[8192]{0}', space=vmem, size = 0x2000, scoped, tag = 'input window, operand 0']
    #allocation3 [shape = 's32[2]{0}', space=sflag, size = 0x8, scoped, tag = 'scoped memory for tpu_custom_call.1']
    #allocation4 [shape = 's32[2]{0}', space=sflag, size = 0x8, scoped, tag = 'scoped memory for tpu_custom_call.1']
    #allocation5 [shape = 'u8[6144]{0}', space=vmem, size = 0x1800, scoped, tag = 'input window, operand 1, single buffered']
    #allocation6 [shape = 's32[1]{0}', space=sflag, size = 0x4, scoped, tag = 'scoped memory for tpu_custom_call.1']
    #allocation7 [shape = 'u8[6144]{0}', space=vmem, size = 0x1800, scoped, tag = 'input window, operand 2, single buffered']
    #allocation8 [shape = 'u8[8192]{0}', space=vmem, size = 0x2000, scoped, tag = 'output window, operand 0']
    %8 = vsyncpa [#allocation3], 0
    %s9 = scalar_lea.sflag [#allocation3], 1
    %10 = vsyncpa %s9, 0
    %11 = vsyncpa [#allocation6], 0
    %12 = vsyncpa [#allocation4], 0
    %s13 = scalar_lea.sflag [#allocation4], 1
    %14 = vsyncpa %s13, 0
    loop: start=0, step=1, limit=4
    $region2: #{tpu_custom_call.1} parent=1 // loop_pre_header
      _
    $region3: #{tpu_custom_call.1} parent=1 // loop_header
      %s16 = sphi 0, %s20
      %p17 = scmp.ge.s32.totalorder %s16, 4
      %s26 = sphi 0, %s28
      %s29 = sphi 0, %s26
      %s30 = sphi 0, %s29
      %s46 = sphi 0, %s30
      %s50 = sphi 0, %s50
      %s52 = sphi 0, %s50
      %s53 = sphi 0, %s52
      %s67 = sphi 0, %s53
      %s71 = sphi 0, %s71
      %s73 = sphi 0, %s71
      %s74 = sphi 0, %s73
      %s88 = sphi 0, %s74
      %s94 = sphi 0, %s96
      %s97 = sphi 0, %s94
      %s98 = sphi 0, %s97
      %s114 = sphi 0, %s98
    $region4: #{tpu_custom_call.1} parent=1 // loop_header_branch
      %19 = sbr.rel (%p17) target = $region8
    $region5: #{tpu_custom_call.1} parent=1 // loop_body
      %s21 = ssub.s32 %s16, 1
      %s22 = ssub.s32 %s16, 2
      %s23 = sadd.s32 %s16, 1
      %s24 = ssub.s32 %s16, %s23
      %p25 = scmp.eq.s32.totalorder %s24, 0
      %s27 = sadd.s32 %s26, 1
      %s28 = scalar_select %p25, %s26, %s27
      %p31 = pneg %p25
      %p32 = scmp.eq.s32.totalorder %s16, 1
      %p33 = por %p31, %p32
      %p34 = scmp.ne.s32.totalorder %s26, %s29
      %p35 = scmp.eq.s32.totalorder %s16, 0
      %p36 = por %p34, %p35
      %p37 = scmp.ne.s32.totalorder %s26, %s29
      %p38 = scmp.eq.s32.totalorder %s21, 1
      %p39 = por %p37, %p38
      %p40 = scmp.ne.s32.totalorder %s29, %s30
      %p41 = scmp.eq.s32.totalorder %s21, 0
      %p42 = por %p40, %p41
      %p43 = scmp.ne.s32.totalorder %s29, %s30
      %p44 = scmp.eq.s32.totalorder %s22, 1
      %p45 = por %p43, %p44
      %p47 = scmp.ne.s32.totalorder %s30, %s46
      %p48 = scmp.eq.s32.totalorder %s22, 0
      %p49 = por %p47, %p48
      %s51 = sadd.s32 %s50, 1
      %p54 = scmp.eq.s32.totalorder %s16, 1
      %p55 = scmp.ne.s32.totalorder %s50, %s52
      %p56 = scmp.eq.s32.totalorder %s16, 0
      %p57 = por %p55, %p56
      %p58 = scmp.ne.s32.totalorder %s50, %s52
      %p59 = scmp.eq.s32.totalorder %s21, 1
      %p60 = por %p58, %p59
      %p61 = scmp.ne.s32.totalorder %s52, %s53
      %p62 = scmp.eq.s32.totalorder %s21, 0
      %p63 = por %p61, %p62
      %p64 = scmp.ne.s32.totalorder %s52, %s53
      %p65 = scmp.eq.s32.totalorder %s22, 1
      %p66 = por %p64, %p65
      %p68 = scmp.ne.s32.totalorder %s53, %s67
      %p69 = scmp.eq.s32.totalorder %s22, 0
      %p70 = por %p68, %p69
      %s72 = sadd.s32 %s71, 1
      %p75 = scmp.eq.s32.totalorder %s16, 1
      %p76 = scmp.ne.s32.totalorder %s71, %s73
      %p77 = scmp.eq.s32.totalorder %s16, 0
      %p78 = por %p76, %p77
      %p79 = scmp.ne.s32.totalorder %s71, %s73
      %p80 = scmp.eq.s32.totalorder %s21, 1
      %p81 = por %p79, %p80
      %p82 = scmp.ne.s32.totalorder %s73, %s74
      %p83 = scmp.eq.s32.totalorder %s21, 0
      %p84 = por %p82, %p83
      %p85 = scmp.ne.s32.totalorder %s73, %s74
      %p86 = scmp.eq.s32.totalorder %s22, 1
      %p87 = por %p85, %p86
      %p89 = scmp.ne.s32.totalorder %s74, %s88
      %p90 = scmp.eq.s32.totalorder %s22, 0
      %p91 = por %p89, %p90
      %s92 = ssub.s32 %s16, %s23
      %p93 = scmp.eq.s32.totalorder %s92, 0
      %s95 = sadd.s32 %s94, 1
      %s96 = scalar_select %p93, %s94, %s95
      %p99 = pneg %p93
      %p100 = scmp.eq.s32.totalorder %s16, 1
      %p101 = por %p99, %p100
      %p102 = scmp.ne.s32.totalorder %s94, %s97
      %p103 = scmp.eq.s32.totalorder %s16, 0
      %p104 = por %p102, %p103
      %p105 = scmp.ne.s32.totalorder %s94, %s97
      %p106 = scmp.eq.s32.totalorder %s21, 1
      %p107 = por %p105, %p106
      %p108 = scmp.ne.s32.totalorder %s97, %s98
      %p109 = scmp.eq.s32.totalorder %s21, 0
      %p110 = por %p108, %p109
      %p111 = scmp.ne.s32.totalorder %s97, %s98
      %p112 = scmp.eq.s32.totalorder %s22, 1
      %p113 = por %p111, %p112
      %p115 = scmp.ne.s32.totalorder %s98, %s114
      %p116 = scmp.eq.s32.totalorder %s22, 0
      %p117 = por %p115, %p116
      %p118 = scmp.le.s32.totalorder 1, %s16
      %p119 = scmp.lt.s32.totalorder %s16, 3
      %p120 = pnand %p118, %p119
      %p121 = pneg %p120
      // Predicated region
      $region9: #{tpu_custom_call.1} parent=5 // pred_check
        _
      $region10: #{tpu_custom_call.1} parent=5 // pred_check_branch
        %123 = sbr.rel (%p120) target = $region12
      $region11: #{tpu_custom_call.1} parent=5 // pred_region
        %s124 = ssub.s32 %s16, 1
        // Predicated region
        $region13: #{tpu_custom_call.1} parent=11 // pred_check
          %p125 = pneg %p63
        $region14: #{tpu_custom_call.1} parent=11 // pred_check_branch
          %127 = sbr.rel (%p125) target = $region16
        $region15: #{tpu_custom_call.1} parent=11 // pred_region
          %s129 = ssub.s32 192, 192
          %130 = vsyncadd [#allocation6], %s129
          %s131 = sshll.u32 [#allocation5], 4
          %s132 = int_to_ptr.vmem [resolvable:$true] %s131
          %137 = dma.hbm_to_vmem [thread:$0]  %s1, 192, %s132, [#allocation6], 64, 64, 4
        $region16: #{tpu_custom_call.1} parent=11 // pred_fallthru
          _
        // Predicated region
        $region17: #{tpu_custom_call.1} parent=11 // pred_check
          %p138 = pneg %p84
        $region18: #{tpu_custom_call.1} parent=11 // pred_check_branch
          %140 = sbr.rel (%p138) target = $region20
        $region19: #{tpu_custom_call.1} parent=11 // pred_region
          %s142 = ssub.s32 192, 192
          %143 = vsyncadd [#allocation6], %s142
          %s144 = sshll.u32 [#allocation7], 4
          %s145 = int_to_ptr.vmem [resolvable:$true] %s144
          %150 = dma.hbm_to_vmem [thread:$0]  %s2, 192, %s145, [#allocation6], 64, 64, 4
        $region20: #{tpu_custom_call.1} parent=11 // pred_fallthru
          _
      $region12: #{tpu_custom_call.1} parent=5 // pred_fallthru
        _
      %p151 = scmp.lt.s32.totalorder %s16, 2
      // Predicated region
      $region21: #{tpu_custom_call.1} parent=5 // pred_check
        %p152 = pneg %p151
      $region22: #{tpu_custom_call.1} parent=5 // pred_check_branch
        %154 = sbr.rel (%p152) target = $region24
      $region23: #{tpu_custom_call.1} parent=5 // pred_region
        // Predicated region
        $region25: #{tpu_custom_call.1} parent=23 // pred_check
          %p155 = pneg %p36
        $region26: #{tpu_custom_call.1} parent=23 // pred_check_branch
          %157 = sbr.rel (%p155) target = $region28
        $region27: #{tpu_custom_call.1} parent=23 // pred_region
          %s158 = sand.u32 %s26, 1
          %s159 = scalar_lea.sflag [#allocation3], %s158
          %s160 = sand.u32 %s26, 1
          %s161 = smul.addr %s160, 8
          %s162 = scalar_lea.vmem [#allocation2], %s161
          %s164 = ssub.s32 128, 128
          %165 = vsyncadd %s159, %s164
          %s166 = smul.addr %s16, 128
          %s167 = scalar_lea.hbm %s0, %s166
          %s169 = sshll.u32 %s162, 4
          %s170 = int_to_ptr.vmem [resolvable:$true] %s169
          %172 = dma.hbm_to_vmem [thread:$0]  %s167, 128, %s170, %s159
        $region28: #{tpu_custom_call.1} parent=23 // pred_fallthru
          _
      $region24: #{tpu_custom_call.1} parent=5 // pred_fallthru
        _
      %p173 = scmp.le.s32.totalorder 1, %s16
      %p174 = scmp.lt.s32.totalorder %s16, 3
      %p175 = pnand %p173, %p174
      %p176 = pneg %p175
      // Predicated region
      $region29: #{tpu_custom_call.1} parent=5 // pred_check
        _
      $region30: #{tpu_custom_call.1} parent=5 // pred_check_branch
        %178 = sbr.rel (%p175) target = $region32
      $region31: #{tpu_custom_call.1} parent=5 // pred_region
        %s179 = ssub.s32 %s16, 1
        %s180 = sand.u32 %s29, 1
        %s181 = scalar_lea.sflag [#allocation3], %s180
        %s182 = sand.u32 %s29, 1
        %s183 = smul.addr %s182, 8
        %s184 = scalar_lea.vmem [#allocation2], %s183
        // Predicated region
        $region33: #{tpu_custom_call.1} parent=31 // pred_check
          %p185 = pneg %p42
        $region34: #{tpu_custom_call.1} parent=31 // pred_check_branch
          %187 = sbr.rel (%p185) target = $region36
        $region35: #{tpu_custom_call.1} parent=31 // pred_region
          %188 = dma.done %s181, 128
        $region36: #{tpu_custom_call.1} parent=31 // pred_fallthru
          _
        // Predicated region
        $region37: #{tpu_custom_call.1} parent=31 // pred_check
          %p189 = pneg %p63
        $region38: #{tpu_custom_call.1} parent=31 // pred_check_branch
          %191 = sbr.rel (%p189) target = $region40
        $region39: #{tpu_custom_call.1} parent=31 // pred_region
          %192 = dma.done [#allocation6], 192
        $region40: #{tpu_custom_call.1} parent=31 // pred_fallthru
          _
        // Predicated region
        $region41: #{tpu_custom_call.1} parent=31 // pred_check
          %p193 = pneg %p84
        $region42: #{tpu_custom_call.1} parent=31 // pred_check_branch
          %195 = sbr.rel (%p193) target = $region44
        $region43: #{tpu_custom_call.1} parent=31 // pred_region
          %196 = dma.done [#allocation6], 192
        $region44: #{tpu_custom_call.1} parent=31 // pred_fallthru
          _
        %s197 = sand.u32 %s29, 1
        %s198 = scalar_lea.sflag [#allocation3], %s197
        %s199 = sand.u32 %s29, 1
        %s200 = smul.addr %s199, 8
        %s201 = scalar_lea.vmem [#allocation2], %s200
        %p202 = pneg %p42
        %p203 = pneg %p39
        %p204 = pneg %p63
        %p205 = pneg %p60
        %p206 = pneg %p84
        %p207 = pneg %p81
        %p208 = pneg %p110
        %p209 = pneg %p107
        %s210 = sand.u32 %s97, 1
        %s211 = scalar_lea.sflag [#allocation4], %s210
        %s212 = sand.u32 %s97, 1
        %s213 = smul.addr %s212, 8
        %s214 = scalar_lea.vmem [#allocation8], %s213
        %v216 = vlaneseq
        %v217 = vand.u32 %v216, 127
        %vm218 = vcmp.eq.s32.totalorder %v217, 0
        %vm219 = vcmp.eq.s32.totalorder %v217, 127
        %v220 = vld [vmem:[#allocation5] sm:$0xf]
        %v221 = vld [vmem:[#allocation5 + $0x4] sm:$0xf]
        %v222 = vld [vmem:[#allocation5 + $0x8] sm:$0xf]
        %v223 = vld [vmem:[#allocation7] sm:$0xf]
        %v224 = vld [vmem:[#allocation7 + $0x4] sm:$0xf]
        %v225 = vld [vmem:[#allocation7 + $0x8] sm:$0xf]
        %v226 = vld [vmem:[%s184] sm:$0xff]
        %227 = vrot.lane.b32.xlu0 %v226, 1
        %v228 = vpop.permute.xlu0 %227
        %229 = vrot.lane.b32.xlu0 %v226, 127
        %v230 = vpop.permute.xlu0 %229
        %v231 = vsel %vm218, 1, 0
        %vm232 = vcmp.eq.s32.totalorder %v231, 1
        %v233 = vsel %vm232, %v230, %v228
        %v234 = vsel %vm219, 1, 0
        %vm235 = vcmp.eq.s32.totalorder %v234, 1
        %v236 = vsel %vm235, %v228, %v230
        %v237 = vpack.c.bf16 %v233, %v233
        %v238 = vpack.c.bf16 %v226, %v226
        %vm239 = vcmask 64512
        %v241 = vsel %vm239, %v221, 0
        %vm243 = vcmask 1043456
        %v245 = vsel %vm243, %v238, 0
        %247 = vmatprep.subr.bf16.mxu0 0
        %248 = vmatpush1.bf16.msra.mxu0 %v245
        %249 = vmatprep.subr.bf16.mxu0 0
        %250 = vmatpush1.bf16.msra.mxu0 0
        %251 = vmatprep.subr.bf16.mxu0 0
        %252 = vmatpush1.bf16.msra.mxu0 0
        %253 = vmatprep.subr.bf16.mxu0 0
        %254 = vmatpush1.bf16.msra.mxu0 0
        %255 = vmatprep.subr.bf16.mxu0 0
        %256 = vmatpush1.bf16.msra.mxu0 0
        %257 = vmatprep.subr.bf16.mxu0 0
        %258 = vmatpush1.bf16.msra.mxu0 0
        %259 = vmatprep.subr.bf16.mxu0 0
        %260 = vmatpush1.bf16.msra.mxu0 0
        %261 = vmatprep.subr.bf16.mxu0 0
        %262 = vmatpush1.bf16.msra.mxu0 0
        %263 = vmatprep.subr.bf16.mxu0 0
        %264 = vmatpush1.bf16.msra.mxu0 0
        %265 = vmatprep.subr.bf16.mxu0 0
        %266 = vmatpush1.bf16.msra.mxu0 0
        %267 = vmatprep.subr.bf16.mxu0 0
        %268 = vmatpush1.bf16.msra.mxu0 0
        %269 = vmatprep.subr.bf16.mxu0 0
        %270 = vmatpush1.bf16.msra.mxu0 0
        %271 = vmatprep.subr.bf16.mxu0 0
        %272 = vmatpush1.bf16.msra.mxu0 0
        %273 = vmatprep.subr.bf16.mxu0 0
        %274 = vmatpush1.bf16.msra.mxu0 0
        %275 = vmatprep.subr.bf16.mxu0 0
        %276 = vmatpush1.bf16.msra.mxu0 0
        %277 = vmatprep.subr.bf16.mxu0 0
        %278 = vmatpush1.bf16.msra.mxu0 0
        %279 = vmatprep.mubr.bf16.mxu0 0
        %280 = vmatmul.mubr.bf16.gmra.mrb[0].mxu0 %v241
        %v281 = vpop.f32.mrb[0].mxu0
        %v282 = vadd.f32 0.0, %v281
        %v283 = vpop.f32.mrb[0].mxu0
        %v284 = vpop.f32.mrb[0].mxu0
        %v285 = vpop.f32.mrb[0].mxu0
        %286 = vdwg.mxu0
        %v288 = vsel %vm239, %v220, 0
        %v291 = vsel %vm243, %v237, 0
        %293 = vmatprep.subr.bf16.mxu0 0
        %294 = vmatpush1.bf16.msra.mxu0 %v291
        %295 = vmatprep.subr.bf16.mxu0 0
        %296 = vmatpush1.bf16.msra.mxu0 0
        %297 = vmatprep.subr.bf16.mxu0 0
        %298 = vmatpush1.bf16.msra.mxu0 0
        %299 = vmatprep.subr.bf16.mxu0 0
        %300 = vmatpush1.bf16.msra.mxu0 0
        %301 = vmatprep.subr.bf16.mxu0 0
        %302 = vmatpush1.bf16.msra.mxu0 0
        %303 = vmatprep.subr.bf16.mxu0 0
        %304 = vmatpush1.bf16.msra.mxu0 0
        %305 = vmatprep.subr.bf16.mxu0 0
        %306 = vmatpush1.bf16.msra.mxu0 0
        %307 = vmatprep.subr.bf16.mxu0 0
        %308 = vmatpush1.bf16.msra.mxu0 0
        %309 = vmatprep.subr.bf16.mxu0 0
        %310 = vmatpush1.bf16.msra.mxu0 0
        %311 = vmatprep.subr.bf16.mxu0 0
        %312 = vmatpush1.bf16.msra.mxu0 0
        %313 = vmatprep.subr.bf16.mxu0 0
        %314 = vmatpush1.bf16.msra.mxu0 0
        %315 = vmatprep.subr.bf16.mxu0 0
        %316 = vmatpush1.bf16.msra.mxu0 0
        %317 = vmatprep.subr.bf16.mxu0 0
        %318 = vmatpush1.bf16.msra.mxu0 0
        %319 = vmatprep.subr.bf16.mxu0 0
        %320 = vmatpush1.bf16.msra.mxu0 0
        %321 = vmatprep.subr.bf16.mxu0 0
        %322 = vmatpush1.bf16.msra.mxu0 0
        %323 = vmatprep.subr.bf16.mxu0 0
        %324 = vmatpush1.bf16.msra.mxu0 0
        %325 = vmatprep.mubr.bf16.mxu0 0
        %326 = vmatmul.mubr.bf16.gmra.mrb[0].mxu0 %v288
        %v327 = vpop.f32.mrb[0].mxu0
        %v328 = vadd.f32 %v282, %v327
        %v329 = vpop.f32.mrb[0].mxu0
        %v330 = vpop.f32.mrb[0].mxu0
        %v331 = vpop.f32.mrb[0].mxu0
        %332 = vdwg.mxu0
        %v333 = vpack.c.bf16 %v236, %v236
        %v335 = vsel %vm239, %v222, 0
        %v338 = vsel %vm243, %v333, 0
        %340 = vmatprep.subr.bf16.mxu0 0
        %341 = vmatpush1.bf16.msra.mxu0 %v338
        %342 = vmatprep.subr.bf16.mxu0 0
        %343 = vmatpush1.bf16.msra.mxu0 0
        %344 = vmatprep.subr.bf16.mxu0 0
        %345 = vmatpush1.bf16.msra.mxu0 0
        %346 = vmatprep.subr.bf16.mxu0 0
        %347 = vmatpush1.bf16.msra.mxu0 0
        %348 = vmatprep.subr.bf16.mxu0 0
        %349 = vmatpush1.bf16.msra.mxu0 0
        %350 = vmatprep.subr.bf16.mxu0 0
        %351 = vmatpush1.bf16.msra.mxu0 0
        %352 = vmatprep.subr.bf16.mxu0 0
        %353 = vmatpush1.bf16.msra.mxu0 0
        %354 = vmatprep.subr.bf16.mxu0 0
        %355 = vmatpush1.bf16.msra.mxu0 0
        %356 = vmatprep.subr.bf16.mxu0 0
        %357 = vmatpush1.bf16.msra.mxu0 0
        %358 = vmatprep.subr.bf16.mxu0 0
        %359 = vmatpush1.bf16.msra.mxu0 0
        %360 = vmatprep.subr.bf16.mxu0 0
        %361 = vmatpush1.bf16.msra.mxu0 0
        %362 = vmatprep.subr.bf16.mxu0 0
        %363 = vmatpush1.bf16.msra.mxu0 0
        %364 = vmatprep.subr.bf16.mxu0 0
        %365 = vmatpush1.bf16.msra.mxu0 0
        %366 = vmatprep.subr.bf16.mxu0 0
        %367 = vmatpush1.bf16.msra.mxu0 0
        %368 = vmatprep.subr.bf16.mxu0 0
        %369 = vmatpush1.bf16.msra.mxu0 0
        %370 = vmatprep.subr.bf16.mxu0 0
        %371 = vmatpush1.bf16.msra.mxu0 0
        %372 = vmatprep.mubr.bf16.mxu0 0
        %373 = vmatmul.mubr.bf16.gmra.mrb[0].mxu0 %v335
        %v374 = vpop.f32.mrb[0].mxu0
        %v375 = vadd.f32 0.0, %v374
        %v376 = vpop.f32.mrb[0].mxu0
        %v377 = vpop.f32.mrb[0].mxu0
        %v378 = vpop.f32.mrb[0].mxu0
        %379 = vdwg.mxu0
        %v380 = vadd.f32 %v328, %v375
        %381 = vadd.xlane.f32.xlu0 %v380
        %v382 = vpop.xlane.xlu0 %381
        %v383 = vrcp.pop 128.0
        %v384 = vmul.f32 %v382, %v383
        %v385 = vsub.f32 %v380, %v384
        %v386 = vmul.f32 %v385, %v385
        %387 = vadd.xlane.f32.xlu0 %v386
        %v388 = vpop.xlane.xlu0 %387
        %v389 = vmul.f32 %v388, %v383
        %v390 = vadd.f32 %v389, 1e-05
        %v391 = vrsqrt.pop %v390
        %v392 = vmul.f32 %v385, %v391
        %v393 = vmax.f32 %v392, 0.0
        %394 = vrot.lane.b32.xlu0 %v393, 1
        %v395 = vpop.permute.xlu0 %394
        %396 = vrot.lane.b32.xlu0 %v393, 127
        %v397 = vpop.permute.xlu0 %396
        %v398 = vsel %vm232, %v397, %v395
        %v399 = vsel %vm235, %v395, %v397
        %v400 = vpack.c.bf16 %v398, %v398
        %v401 = vpack.c.bf16 %v393, %v393
        %v403 = vsel %vm239, %v224, 0
        %v406 = vsel %vm243, %v401, 0
        %408 = vmatprep.subr.bf16.mxu0 0
        %409 = vmatpush1.bf16.msra.mxu0 %v406
        %410 = vmatprep.subr.bf16.mxu0 0
        %411 = vmatpush1.bf16.msra.mxu0 0
        %412 = vmatprep.subr.bf16.mxu0 0
        %413 = vmatpush1.bf16.msra.mxu0 0
        %414 = vmatprep.subr.bf16.mxu0 0
        %415 = vmatpush1.bf16.msra.mxu0 0
        %416 = vmatprep.subr.bf16.mxu0 0
        %417 = vmatpush1.bf16.msra.mxu0 0
        %418 = vmatprep.subr.bf16.mxu0 0
        %419 = vmatpush1.bf16.msra.mxu0 0
        %420 = vmatprep.subr.bf16.mxu0 0
        %421 = vmatpush1.bf16.msra.mxu0 0
        %422 = vmatprep.subr.bf16.mxu0 0
        %423 = vmatpush1.bf16.msra.mxu0 0
        %424 = vmatprep.subr.bf16.mxu0 0
        %425 = vmatpush1.bf16.msra.mxu0 0
        %426 = vmatprep.subr.bf16.mxu0 0
        %427 = vmatpush1.bf16.msra.mxu0 0
        %428 = vmatprep.subr.bf16.mxu0 0
        %429 = vmatpush1.bf16.msra.mxu0 0
        %430 = vmatprep.subr.bf16.mxu0 0
        %431 = vmatpush1.bf16.msra.mxu0 0
        %432 = vmatprep.subr.bf16.mxu0 0
        %433 = vmatpush1.bf16.msra.mxu0 0
        %434 = vmatprep.subr.bf16.mxu0 0
        %435 = vmatpush1.bf16.msra.mxu0 0
        %436 = vmatprep.subr.bf16.mxu0 0
        %437 = vmatpush1.bf16.msra.mxu0 0
        %438 = vmatprep.subr.bf16.mxu0 0
        %439 = vmatpush1.bf16.msra.mxu0 0
        %440 = vmatprep.mubr.bf16.mxu0 0
        %441 = vmatmul.mubr.bf16.gmra.mrb[0].mxu0 %v403
        %v442 = vpop.f32.mrb[0].mxu0
        %v443 = vadd.f32 0.0, %v442
        %v444 = vpop.f32.mrb[0].mxu0
        %v445 = vpop.f32.mrb[0].mxu0
        %v446 = vpop.f32.mrb[0].mxu0
        %447 = vdwg.mxu0
        %v449 = vsel %vm239, %v223, 0
        %v452 = vsel %vm243, %v400, 0
        %454 = vmatprep.subr.bf16.mxu0 0
        %455 = vmatpush1.bf16.msra.mxu0 %v452
        %456 = vmatprep.subr.bf16.mxu0 0
        %457 = vmatpush1.bf16.msra.mxu0 0
        %458 = vmatprep.subr.bf16.mxu0 0
        %459 = vmatpush1.bf16.msra.mxu0 0
        %460 = vmatprep.subr.bf16.mxu0 0
        %461 = vmatpush1.bf16.msra.mxu0 0
        %462 = vmatprep.subr.bf16.mxu0 0
        %463 = vmatpush1.bf16.msra.mxu0 0
        %464 = vmatprep.subr.bf16.mxu0 0
        %465 = vmatpush1.bf16.msra.mxu0 0
        %466 = vmatprep.subr.bf16.mxu0 0
        %467 = vmatpush1.bf16.msra.mxu0 0
        %468 = vmatprep.subr.bf16.mxu0 0
        %469 = vmatpush1.bf16.msra.mxu0 0
        %470 = vmatprep.subr.bf16.mxu0 0
        %471 = vmatpush1.bf16.msra.mxu0 0
        %472 = vmatprep.subr.bf16.mxu0 0
        %473 = vmatpush1.bf16.msra.mxu0 0
        %474 = vmatprep.subr.bf16.mxu0 0
        %475 = vmatpush1.bf16.msra.mxu0 0
        %476 = vmatprep.subr.bf16.mxu0 0
        %477 = vmatpush1.bf16.msra.mxu0 0
        %478 = vmatprep.subr.bf16.mxu0 0
        %479 = vmatpush1.bf16.msra.mxu0 0
        %480 = vmatprep.subr.bf16.mxu0 0
        %481 = vmatpush1.bf16.msra.mxu0 0
        %482 = vmatprep.subr.bf16.mxu0 0
        %483 = vmatpush1.bf16.msra.mxu0 0
        %484 = vmatprep.subr.bf16.mxu0 0
        %485 = vmatpush1.bf16.msra.mxu0 0
        %486 = vmatprep.mubr.bf16.mxu0 0
        %487 = vmatmul.mubr.bf16.gmra.mrb[0].mxu0 %v449
        %v488 = vpop.f32.mrb[0].mxu0
        %v489 = vadd.f32 %v443, %v488
        %v490 = vpop.f32.mrb[0].mxu0
        %v491 = vpop.f32.mrb[0].mxu0
        %v492 = vpop.f32.mrb[0].mxu0
        %493 = vdwg.mxu0
        %v494 = vpack.c.bf16 %v399, %v399
        %v496 = vsel %vm239, %v225, 0
        %v499 = vsel %vm243, %v494, 0
        %501 = vmatprep.subr.bf16.mxu0 0
        %502 = vmatpush1.bf16.msra.mxu0 %v499
        %503 = vmatprep.subr.bf16.mxu0 0
        %504 = vmatpush1.bf16.msra.mxu0 0
        %505 = vmatprep.subr.bf16.mxu0 0
        %506 = vmatpush1.bf16.msra.mxu0 0
        %507 = vmatprep.subr.bf16.mxu0 0
        %508 = vmatpush1.bf16.msra.mxu0 0
        %509 = vmatprep.subr.bf16.mxu0 0
        %510 = vmatpush1.bf16.msra.mxu0 0
        %511 = vmatprep.subr.bf16.mxu0 0
        %512 = vmatpush1.bf16.msra.mxu0 0
        %513 = vmatprep.subr.bf16.mxu0 0
        %514 = vmatpush1.bf16.msra.mxu0 0
        %515 = vmatprep.subr.bf16.mxu0 0
        %516 = vmatpush1.bf16.msra.mxu0 0
        %517 = vmatprep.subr.bf16.mxu0 0
        %518 = vmatpush1.bf16.msra.mxu0 0
        %519 = vmatprep.subr.bf16.mxu0 0
        %520 = vmatpush1.bf16.msra.mxu0 0
        %521 = vmatprep.subr.bf16.mxu0 0
        %522 = vmatpush1.bf16.msra.mxu0 0
        %523 = vmatprep.subr.bf16.mxu0 0
        %524 = vmatpush1.bf16.msra.mxu0 0
        %525 = vmatprep.subr.bf16.mxu0 0
        %526 = vmatpush1.bf16.msra.mxu0 0
        %527 = vmatprep.subr.bf16.mxu0 0
        %528 = vmatpush1.bf16.msra.mxu0 0
        %529 = vmatprep.subr.bf16.mxu0 0
        %530 = vmatpush1.bf16.msra.mxu0 0
        %531 = vmatprep.subr.bf16.mxu0 0
        %532 = vmatpush1.bf16.msra.mxu0 0
        %533 = vmatprep.mubr.bf16.mxu0 0
        %534 = vmatmul.mubr.bf16.gmra.mrb[0].mxu0 %v496
        %v535 = vpop.f32.mrb[0].mxu0
        %v536 = vadd.f32 0.0, %v535
        %v537 = vpop.f32.mrb[0].mxu0
        %v538 = vpop.f32.mrb[0].mxu0
        %v539 = vpop.f32.mrb[0].mxu0
        %540 = vdwg.mxu0
        %v541 = vadd.f32 %v489, %v536
        %542 = vadd.xlane.f32.xlu0 %v541
        %v543 = vpop.xlane.xlu0 %542
        %v544 = vmul.f32 %v543, %v383
        %v545 = vsub.f32 %v541, %v544
        %v546 = vmul.f32 %v545, %v545
        %547 = vadd.xlane.f32.xlu0 %v546
        %v548 = vpop.xlane.xlu0 %547
        %v549 = vmul.f32 %v548, %v383
        %v550 = vadd.f32 %v549, 1e-05
        %v551 = vrsqrt.pop %v550
        %v552 = vmul.f32 %v545, %v551
        %v553 = vadd.f32 %v226, %v552
        %554 = vst [vmem:[%s214] sm:$0xff] %v553
        %s555 = sand.u32 %s97, 1
        %s556 = scalar_lea.sflag [#allocation4], %s555
        %s557 = sand.u32 %s97, 1
        %s558 = smul.addr %s557, 8
        %s559 = scalar_lea.vmem [#allocation8], %s558
        // Predicated region
        $region45: #{tpu_custom_call.1} parent=31 // pred_check
          %p560 = pneg %p107
        $region46: #{tpu_custom_call.1} parent=31 // pred_check_branch
          %562 = sbr.rel (%p560) target = $region48
        $region47: #{tpu_custom_call.1} parent=31 // pred_region
          %s564 = ssub.s32 128, 128
          %565 = vsyncadd %s556, %s564
          %s566 = smul.addr %s21, 128
          %s567 = scalar_lea.hbm %s3, %s566
          %s569 = sshll.u32 %s559, 4
          %s570 = int_to_ptr.vmem [resolvable:$true] %s569
          %572 = dma.vmem_to_hbm [thread:$0]  %s570, 128, %s567, %s556
        $region48: #{tpu_custom_call.1} parent=31 // pred_fallthru
          _
      $region32: #{tpu_custom_call.1} parent=5 // pred_fallthru
        _
      %p573 = scmp.le.s32.totalorder 2, %s16
      // Predicated region
      $region49: #{tpu_custom_call.1} parent=5 // pred_check
        %p574 = pneg %p573
      $region50: #{tpu_custom_call.1} parent=5 // pred_check_branch
        %576 = sbr.rel (%p574) target = $region52
      $region51: #{tpu_custom_call.1} parent=5 // pred_region
        %s577 = ssub.s32 %s16, 2
        // Predicated region
        $region53: #{tpu_custom_call.1} parent=51 // pred_check
          %p578 = pneg %p113
        $region54: #{tpu_custom_call.1} parent=51 // pred_check_branch
          %580 = sbr.rel (%p578) target = $region56
        $region55: #{tpu_custom_call.1} parent=51 // pred_region
          %s581 = sand.u32 %s98, 1
          %s582 = scalar_lea.sflag [#allocation4], %s581
          %s583 = sand.u32 %s98, 1
          %s584 = smul.addr %s583, 8
          %s585 = scalar_lea.vmem [#allocation8], %s584
          %586 = dma.done %s582, 128
        $region56: #{tpu_custom_call.1} parent=51 // pred_fallthru
          _
      $region52: #{tpu_custom_call.1} parent=5 // pred_fallthru
        _
    $region6: #{tpu_custom_call.1} parent=1 // loop_footer
      %s20 = sadd.s32 1, %s16
    $region7: #{tpu_custom_call.1} parent=1 // loop_footer_branch
      %15 = sbr.rel target = $region3
    $region8: #{tpu_custom_call.1} parent=1 // loop_exit
      _
    %587 = vsyncpa [#allocation3], 1
    %s588 = scalar_lea.sflag [#allocation3], 1
    %589 = vsyncpa %s588, 1
    %590 = vsyncpa [#allocation6], 1
    %591 = vsyncpa [#allocation4], 1
    %s592 = scalar_lea.sflag [#allocation4], 1
    %593 = vsyncpa %s592, 1

</llo_original>
